<compile_context>
chip_gen: v6e
topology: v6e:2x2x1
jax: 0.10.0
libtpu: 0.0.40
codegen_flags: <defaults>
</compile_context>

<pallas_src>
import functools

import jax
import jax.numpy as jnp
from jax.experimental import pallas as pl
from jax.experimental.pallas import tpu as pltpu


# ----------------------------------------------------------------------------
# Kernels
# ----------------------------------------------------------------------------
def _score_kernel(z_ref, w1b_ref, b1c_ref, gw_ref, part_ref, *,
                  tile_r, inner_tiles, n_true):
    """Phase A: accumulate per-metapath score sums into a (1,1,M) VMEM block.

    z_ref    : (tile_r, M*D)   lane-dense tile of node features
    w1b_ref  : (M*D, M*H)      block-diagonal Linear1 weight (bf16)
    b1c_ref  : (1, M*H)        tiled Linear1 bias (f32)
    gw_ref   : (M*H, M)        per-metapath grouping matrix with W2 folded (bf16)
    part_ref : (1, 1, M)       f32 partial-sum accumulator for this p-slice
    """
    p = pl.program_id(0)
    t = pl.program_id(1)

    @pl.when(t == 0)
    def _init():
        part_ref[...] = jnp.zeros_like(part_ref)

    z = z_ref[...].astype(jnp.bfloat16)
    h = jnp.tanh(
        jnp.dot(z, w1b_ref[...], preferred_element_type=jnp.float32)
        + b1c_ref[...]
    )                                                          # (tile_r, M*H) f32
    scores = jnp.dot(h.astype(jnp.bfloat16), gw_ref[...],
                     preferred_element_type=jnp.float32)       # (tile_r, M)

    # Mask rows past the true node count (partial last tile / clamped extra
    # tiles); jnp.where is a select, so garbage (even NaN) cannot leak through.
    row0 = (p * inner_tiles + t) * tile_r
    rows = row0 + jax.lax.broadcasted_iota(jnp.int32, scores.shape, 0)
    scores = jnp.where(rows < n_true, scores, 0.0)

    part_ref[...] += jnp.sum(scores, axis=0)[None, None, :]


def _combine_kernel(z_ref, b_ref, out_ref):
    """Phase B: out = z @ B, beta already folded into B wrapper-side."""
    out_ref[...] = jnp.dot(
        z_ref[...].astype(jnp.float32), b_ref[...],
        preferred_element_type=jnp.float32,
    ).astype(out_ref.dtype)


# ----------------------------------------------------------------------------
# Wrapper
# ----------------------------------------------------------------------------
def _round_up(x, m):
    return (x + m - 1) // m * m


def _vmem_capacity_bytes():
    try:
        return int(pltpu.get_tpu_info().vmem_capacity_bytes)
    except Exception:
        return 64 * 1024 * 1024          # conservative (v7x per-core VMEM)


def semantic_attention(z, w1, b1, w2, *, tile_rows=None):
    """HAN semantic attention forward.

    z  : (N, M, D)  nodes x metapaths x features
    w1 : (D, H)  == torch Linear1.weight.T      b1 : (H,) or (1, H)
    w2 : (H, 1) or (H,) == torch Linear2.weight.T (bias-free)
    returns (N, D)
    """
    N, M, D = z.shape
    H = w1.shape[1]
    f32 = jnp.float32
    bf16 = jnp.bfloat16

    w1f = jnp.asarray(w1, f32)
    b1f = jnp.asarray(b1, f32).reshape(1, H)
    w2f = jnp.asarray(w2, f32).reshape(H, 1)

    W = M * D
    z2 = z.reshape(N, W)                 # contiguous -> free (bitcast) view

    # Tiny constants, built once (wrapper-side XLA). bf16 inputs for the MXU.
    w1_block = jnp.kron(jnp.eye(M, dtype=f32), w1f).astype(bf16)    # (W, M*H)
    b1_cat = jnp.tile(b1f, (1, M))                                  # (1, M*H)
    gw = jnp.kron(jnp.eye(M, dtype=f32), w2f).astype(bf16)          # (M*H, M)

    # ---- tiling (VMEM-aware, capped) ------------------------------------
    vmem = _vmem_capacity_bytes()
    vmem_limit = int(min(vmem // 2, 64 * 1024 * 1024))
    row_bytes = W * jnp.dtype(z.dtype).itemsize
    budget = max(vmem // 8, 2 * 8 * row_bytes)          # double-buffered z tile
    cap_by_vmem = max(8, (budget // (2 * row_bytes)) // 8 * 8)
    if tile_rows is None:
        tile_r = min(512, cap_by_vmem, _round_up(N, 8))
    else:
        tile_r = min(max(8, _round_up(int(tile_rows), 8)), cap_by_vmem)
    tile_r = max(8, tile_r)

    num_tiles = pl.cdiv(N, tile_r)
    P = 2 if num_tiles >= 2 else 1       # v7x megacore split; harmless on 1-TC parts
    T = pl.cdiv(num_tiles, P)

    def const_spec(a):
        return pl.BlockSpec(a.shape, lambda p, t: (0,) * a.ndim)

    def z_map_a(p, t):
        # (p, t) combos past the last tile are clamped to a valid tile; their
        # logical rows are >= N so the in-kernel mask zeroes their contribution.
        return (jnp.minimum(p * T + t, num_tiles - 1), 0)

    # ---- Phase A: streamed score accumulation --------------------------
    partial = pl.pallas_call(
        functools.partial(_score_kernel, tile_r=tile_r, inner_tiles=T, n_true=N),
        out_shape=jax.ShapeDtypeStruct((P, 1, M), f32),
        grid_spec=pl.GridSpec(
            grid=(P, T),
            in_specs=[pl.BlockSpec((tile_r, W), z_map_a),
                      const_spec(w1_block), const_spec(b1_cat), const_spec(gw)],
            out_specs=pl.BlockSpec((1, 1, M), lambda p, t: (p, 0, 0)),
        ),
        compiler_params=pltpu.CompilerParams(
            dimension_semantics=("parallel", "arbitrary"),
            vmem_limit_bytes=vmem_limit,
        ),
    )(z2, w1_block, b1_cat, gw)

    # Mean over the true node count + softmax over metapaths (tiny, f32).
    w_mean = partial.sum(axis=(0, 1)) / N               # (M,)
    beta = jax.nn.softmax(w_mean)                       # (M,)

    # Fold beta into the combine matrix once: out[n,:] = sum_m beta[m] z[n,m,:].
    B = jnp.kron(beta.reshape(M, 1).astype(f32), jnp.eye(D, dtype=f32))  # (W, D)

    # ---- Phase B: streamed beta-weighted combine ------------------------
    out = pl.pallas_call(
        _combine_kernel,
        out_shape=jax.ShapeDtypeStruct((N, D), z.dtype),
        grid_spec=pl.GridSpec(
            grid=(num_tiles,),
            in_specs=[pl.BlockSpec((tile_r, W), lambda i: (i, 0)),
                      pl.BlockSpec(B.shape, lambda i: (0, 0))],
            out_specs=pl.BlockSpec((tile_r, D), lambda i: (i, 0)),
        ),
        compiler_params=pltpu.CompilerParams(
            dimension_semantics=("parallel",),
            vmem_limit_bytes=vmem_limit,
        ),
    )(z2, B)

    return out


# ----------------------------------------------------------------------------
# Pure-JAX reference mirroring the PyTorch forward
# ----------------------------------------------------------------------------
def semantic_attention_ref(z, w1, b1, w2):
    h = jnp.tanh(jnp.einsum("nmd,dh->nmh", z, w1) + b1.reshape(1, 1, -1))
    w = jnp.einsum("nmh,ho->nmo", h, w2.reshape(-1, 1))     # (N, M, 1)
    w = w.mean(axis=0)                                      # (M, 1)
    beta = jax.nn.softmax(w, axis=0)                        # (M, 1)
    beta = jnp.broadcast_to(beta, (z.shape[0],) + beta.shape)
    return (beta * z).sum(axis=1)                           # (N, D)


if __name__ == "__main__":
    # nodes, metapaths, in_size, hidden_size (M*D = 128 -> lane-dense rows)
    N, M, D, H = 300, 4, 32, 16

    key = jax.random.PRNGKey(0)
    kz, kw1, kb1, kw2 = jax.random.split(key, 4)
    z = jax.random.normal(kz, (N, M, D), dtype=jnp.float32)
    w1 = jax.random.normal(kw1, (D, H), dtype=jnp.float32) * 0.1
    b1 = jax.random.normal(kb1, (1, H), dtype=jnp.float32) * 0.1
    w2 = jax.random.normal(kw2, (H, 1), dtype=jnp.float32) * 0.1

    ref = jax.block_until_ready(semantic_attention_ref(z, w1, b1, w2))

    # Default tiling (single tile here, P=1).
    out = jax.block_until_ready(semantic_attention(z, w1, b1, w2))
    assert out.shape == (N, D), out.shape
    assert jnp.allclose(out, ref, atol=1e-2, rtol=1e-2), "default path mismatch"

    # Force several tiles: exercises the (parallel, arbitrary) 2-D score grid,
    # the clamped index_map, the partial-last-tile row mask and the streamed
    # combine over multiple tiles.
    out_tiled = jax.block_until_ready(
        semantic_attention(z, w1, b1, w2, tile_rows=64))
    assert out_tiled.shape == (N, D), out_tiled.shape
    assert jnp.allclose(out_tiled, ref, atol=1e-2, rtol=1e-2), "tiled path mismatch"

    print("KERNEL_OK")
</pallas_src>

<mosaic_0001>
module attributes {stable_mosaic.version = 11 : i64} {
  func.func @_score_kernel(%arg0: i32, %arg1: i32, %arg2: memref<304x128xf32, #tpu.memory_space<vmem>>, %arg3: memref<128x64xbf16, #tpu.memory_space<vmem>>, %arg4: memref<1x64xf32, #tpu.memory_space<vmem>>, %arg5: memref<64x4xbf16, #tpu.memory_space<vmem>>, %arg6: memref<1x1x4xf32, #tpu.memory_space<vmem>>) attributes {dimension_semantics = [#tpu.dimension_semantics<parallel>, #tpu.dimension_semantics<arbitrary>], iteration_bounds = array<i64: 1, 1>, scalar_prefetch = 0 : i64, scratch_operands = 0 : i64, tpu.core_type = #tpu.core_type<tc>, window_params = [{transform_indices = @transform_0, window_bounds = array<i64: 304, 128>}, {pipeline_mode = #tpu.pipeline_mode<synchronous>, transform_indices = @transform_1, window_bounds = array<i64: 128, 64>}, {pipeline_mode = #tpu.pipeline_mode<synchronous>, transform_indices = @transform_2, window_bounds = array<i64: 1, 64>}, {pipeline_mode = #tpu.pipeline_mode<synchronous>, transform_indices = @transform_3, window_bounds = array<i64: 64, 4>}, {transform_indices = @transform_4, window_bounds = array<i64: 1, 1, 4>}]} {
    %c0_i32 = arith.constant 0 : i32
    %0 = arith.cmpi eq, %arg1, %c0_i32 : i32
    %1 = arith.extui %0 : i1 to i32
    %c0_i32_0 = arith.constant 0 : i32
    %2 = arith.cmpi ne, %1, %c0_i32_0 : i32
    scf.if %2 {
      %cst_17 = arith.constant 0.000000e+00 : f32
      %29 = vector.broadcast %cst_17 : f32 to vector<1x1x4xf32>
      %c0_18 = arith.constant 0 : index
      %c0_19 = arith.constant 0 : index
      %c0_20 = arith.constant 0 : index
      %30 = vector.load %arg6[%c0_18, %c0_19, %c0_20] : memref<1x1x4xf32, #tpu.memory_space<vmem>>, vector<1x1x4xf32>
      tpu.vector_store %arg6[%c0_18, %c0_19, %c0_20], %29 {strides = array<i32>} : memref<1x1x4xf32, #tpu.memory_space<vmem>>, vector<1x1x4xf32>,
    } else {
    }
    %c0 = arith.constant 0 : index
    %c0_1 = arith.constant 0 : index
    %3 = vector.load %arg2[%c0, %c0_1] : memref<304x128xf32, #tpu.memory_space<vmem>>, vector<304x128xf32>
    %4 = arith.truncf %3 : vector<304x128xf32> to vector<304x128xbf16>
    %c0_2 = arith.constant 0 : index
    %c0_3 = arith.constant 0 : index
    %5 = vector.load %arg3[%c0_2, %c0_3] : memref<128x64xbf16, #tpu.memory_space<vmem>>, vector<128x64xbf16>
    %cst = arith.constant dense<0.000000e+00> : vector<304x64xf32>
    %6 = tpu.matmul %4, %5, %cst {dimension_numbers = #tpu.dot_dimension_numbers<[1], [0], [0], [1], [0, 0, 1, 1], [], []>} : vector<304x128xbf16>, vector<128x64xbf16>, vector<304x64xf32> -> vector<304x64xf32>
    %c0_4 = arith.constant 0 : index
    %c0_5 = arith.constant 0 : index
    %7 = vector.load %arg4[%c0_4, %c0_5] : memref<1x64xf32, #tpu.memory_space<vmem>>, vector<1x64xf32>
    %8 = vector.broadcast %7 : vector<1x64xf32> to vector<304x64xf32>
    %9 = arith.addf %6, %8 : vector<304x64xf32>
    %10 = math.tanh %9 : vector<304x64xf32>
    %11 = arith.truncf %10 : vector<304x64xf32> to vector<304x64xbf16>
    %c0_6 = arith.constant 0 : index
    %c0_7 = arith.constant 0 : index
    %12 = vector.load %arg5[%c0_6, %c0_7] : memref<64x4xbf16, #tpu.memory_space<vmem>>, vector<64x4xbf16>
    %cst_8 = arith.constant dense<0.000000e+00> : vector<304x4xf32>
    %13 = tpu.matmul %11, %12, %cst_8 {dimension_numbers = #tpu.dot_dimension_numbers<[1], [0], [0], [1], [0, 0, 1, 1], [], []>} : vector<304x64xbf16>, vector<64x4xbf16>, vector<304x4xf32> -> vector<304x4xf32>
    %c1_i32 = arith.constant 1 : i32
    %14 = arith.muli %arg0, %c1_i32 : i32
    %15 = arith.addi %14, %arg1 : i32
    %c304_i32 = arith.constant 304 : i32
    %16 = arith.muli %15, %c304_i32 : i32
    %17 = tpu.iota {dimensions = array<i32: 0>} : vector<304x4xi32>
    %18 = vector.broadcast %16 : i32 to vector<304x4xi32>
    %19 = arith.addi %18, %17 : vector<304x4xi32>
    %c300_i32 = arith.constant 300 : i32
    %20 = vector.broadcast %c300_i32 : i32 to vector<304x4xi32>
    %21 = arith.cmpi slt, %19, %20 : vector<304x4xi32>
    %cst_9 = arith.constant 0.000000e+00 : f32
    %22 = vector.broadcast %cst_9 : f32 to vector<304x4xf32>
    %23 = arith.select %21, %13, %22 : vector<304x4xi1>, vector<304x4xf32>
    %c0_10 = arith.constant 0 : index
    %c0_11 = arith.constant 0 : index
    %c0_12 = arith.constant 0 : index
    %24 = vector.load %arg6[%c0_10, %c0_11, %c0_12] : memref<1x1x4xf32, #tpu.memory_space<vmem>>, vector<1x1x4xf32>
    %cst_13 = arith.constant dense<0.000000e+00> : vector<4xf32>
    %25 = vector.multi_reduction <add>, %23, %cst_13 [0] : vector<304x4xf32> to vector<4xf32>
    %26 = vector.shape_cast %25 : vector<4xf32> to vector<1x1x4xf32>
    %27 = arith.addf %24, %26 : vector<1x1x4xf32>
    %c0_14 = arith.constant 0 : index
    %c0_15 = arith.constant 0 : index
    %c0_16 = arith.constant 0 : index
    %28 = vector.load %arg6[%c0_14, %c0_15, %c0_16] : memref<1x1x4xf32, #tpu.memory_space<vmem>>, vector<1x1x4xf32>
    tpu.vector_store %arg6[%c0_14, %c0_15, %c0_16], %27 {strides = array<i32>} : memref<1x1x4xf32, #tpu.memory_space<vmem>>, vector<1x1x4xf32>,
    return
  }
  func.func @transform_0(%arg0: i32, %arg1: i32) -> (i32, i32) {
    %c1_i32 = arith.constant 1 : i32
    %0 = arith.muli %arg0, %c1_i32 : i32
    %1 = arith.addi %0, %arg1 : i32
    %c0_i32 = arith.constant 0 : i32
    %2 = arith.minsi %1, %c0_i32 : i32
    %c0_i32_0 = arith.constant 0 : i32
    %c0_i32_1 = arith.constant 0 : i32
    return %2, %c0_i32_0 : i32, i32
  }
  func.func @transform_1(%arg0: i32, %arg1: i32) -> (i32, i32) {
    %c0_i32 = arith.constant 0 : i32
    %c0_i32_0 = arith.constant 0 : i32
    %c0_i32_1 = arith.constant 0 : i32
    return %c0_i32, %c0_i32_0 : i32, i32
  }
  func.func @transform_2(%arg0: i32, %arg1: i32) -> (i32, i32) {
    %c0_i32 = arith.constant 0 : i32
    %c0_i32_0 = arith.constant 0 : i32
    %c0_i32_1 = arith.constant 0 : i32
    return %c0_i32, %c0_i32_0 : i32, i32
  }
  func.func @transform_3(%arg0: i32, %arg1: i32) -> (i32, i32) {
    %c0_i32 = arith.constant 0 : i32
    %c0_i32_0 = arith.constant 0 : i32
    %c0_i32_1 = arith.constant 0 : i32
    return %c0_i32, %c0_i32_0 : i32, i32
  }
  func.func @transform_4(%arg0: i32, %arg1: i32) -> (i32, i32, i32) {
    %c0_i32 = arith.constant 0 : i32
    %c0_i32_0 = arith.constant 0 : i32
    %c0_i32_1 = arith.constant 0 : i32
    return %arg0, %c0_i32, %c0_i32_0 : i32, i32, i32
  }
}

</mosaic_0001>

<llo_original>
// kernel: tpu_custom_call.1
$region0: #{tpu_custom_call.1}
  #allocation0 [shape = 'u32[]', space=smem, size = 0x4, offset = 0x4, fixed_abs, tag = 'smem constant byte address 0x4 - core index']
  #allocation1 [shape = 'u32[144,128]{1,0:T(1,128)}', space=vmem, size = 0x12000, scoped, tag = 'internal scratch']
  %s0 = inlined_call_operand.hbm [shape: f32[300,128], index: 0, kind: input, shape index: {}]
  %s1 = inlined_call_operand.vmem [shape: bf16[128,64], index: 1, kind: input, shape index: {}]
  %s2 = inlined_call_operand.vmem [shape: f32[1,64], index: 2, kind: input, shape index: {}]
  %s3 = inlined_call_operand.vmem [shape: bf16[64,4], index: 3, kind: input, shape index: {}]
  %s4 = inlined_call_operand.hbm [shape: f32[1,1,4], index: 4, kind: output, shape index: {}]
  %s5 = sld [smem:[#allocation0]]
  $region34: #{tpu_custom_call.1} parent=0
    _
  %s7 = ssub.s32 1, %s5
  %s8 = scalar_select 0, %s7, %s5
  $region1: #{tpu_custom_call.1} parent=0
    #allocation2 [shape = 'u8[155648]{0}', space=vmem, size = 0x26000, scoped, tag = 'input window, operand 0, single buffered']
    #allocation3 [shape = 's32[1]{0}', space=sflag, size = 0x4, scoped, tag = 'scoped memory for tpu_custom_call.1']
    #allocation4 [shape = 's32[1]{0}', space=sflag, size = 0x4, scoped, tag = 'scoped memory for tpu_custom_call.1']
    #allocation5 [shape = 'u8[512]{0}', space=vmem, size = 0x400, scoped, tag = 'output window, operand 0, single buffered']
    %9 = vsyncpa [#allocation3], 0
    %10 = vsyncpa [#allocation4], 0
    // Predicated region
    $region2: #{tpu_custom_call.1} parent=1 // pred_check
      _
    $region3: #{tpu_custom_call.1} parent=1 // pred_check_branch
      %12 = sbr.rel (0) target = $region5
    $region4: #{tpu_custom_call.1} parent=1 // pred_region
      %s13 = sadd.s32 0, 0
      %p14 = scmp.lt.s32.totalorder %s13, 0
      %s15 = scalar_select %p14, %s13, 0
      %s16 = smul.u32 38, %s15
      %s18 = ssub.s32 4864, 4864
      %19 = vsyncadd [#allocation3], %s18
      %s20 = smul.addr %s16, 128
      %s21 = scalar_lea.hbm %s0, %s20
      %s22 = sshll.u32 [#allocation2], 4
      %s23 = int_to_ptr.vmem [resolvable:$true] %s22
      %28 = dma.hbm_to_vmem [thread:$0]  %s21, 4864, %s23, [#allocation3], 128, 128, 8
    $region5: #{tpu_custom_call.1} parent=1 // pred_fallthru
      _
    // Predicated region
    $region6: #{tpu_custom_call.1} parent=1 // pred_check
      _
    $region7: #{tpu_custom_call.1} parent=1 // pred_check_branch
      %30 = sbr.rel (0) target = $region9
    $region8: #{tpu_custom_call.1} parent=1 // pred_region
      _
    $region9: #{tpu_custom_call.1} parent=1 // pred_fallthru
      _
    // Predicated region
    $region10: #{tpu_custom_call.1} parent=1 // pred_check
      _
    $region11: #{tpu_custom_call.1} parent=1 // pred_check_branch
      %32 = sbr.rel (0) target = $region13
    $region12: #{tpu_custom_call.1} parent=1 // pred_region
      _
    $region13: #{tpu_custom_call.1} parent=1 // pred_fallthru
      _
    // Predicated region
    $region14: #{tpu_custom_call.1} parent=1 // pred_check
      _
    $region15: #{tpu_custom_call.1} parent=1 // pred_check_branch
      %34 = sbr.rel (0) target = $region17
    $region16: #{tpu_custom_call.1} parent=1 // pred_region
      _
    $region17: #{tpu_custom_call.1} parent=1 // pred_fallthru
      _
    // Predicated region
    $region18: #{tpu_custom_call.1} parent=1 // pred_check
      _
    $region19: #{tpu_custom_call.1} parent=1 // pred_check_branch
      %36 = sbr.rel (0) target = $region21
    $region20: #{tpu_custom_call.1} parent=1 // pred_region
      %37 = dma.done [#allocation3], 4864
    $region21: #{tpu_custom_call.1} parent=1 // pred_fallthru
      _
    %s38 = sadd.s32 0, 0
    %p39 = scmp.lt.s32.totalorder %s38, 0
    %s40 = scalar_select %p39, %s38, 0
    %s41 = smul.u32 38, %s40
    %p43 = scmp.eq.s32.totalorder 0, 0
    // Predicated region
    $region22: #{tpu_custom_call.1} parent=1 // pred_check
      %p44 = pneg %p43
    $region23: #{tpu_custom_call.1} parent=1 // pred_check_branch
      %46 = sbr.rel (%p44) target = $region25
    $region24: #{tpu_custom_call.1} parent=1 // pred_region
      %vm47 = vcmask 24576
      %48 = vst.msk [vmem:[#allocation5] sm:$0x1] %vm47, 0.0
    $region25: #{tpu_custom_call.1} parent=1 // pred_fallthru
      _
    %v49 = vld [vmem:[#allocation2] sm:$0xff]
    %v50 = vld [vmem:[#allocation2 + $0x8] sm:$0xff]
    %v51 = vld [vmem:[#allocation2 + $0x10] sm:$0xff]
    %v52 = vld [vmem:[#allocation2 + $0x18] sm:$0xff]
    %v53 = vld [vmem:[#allocation2 + $0x20] sm:$0xff]
    %v54 = vld [vmem:[#allocation2 + $0x28] sm:$0xff]
    %v55 = vld [vmem:[#allocation2 + $0x30] sm:$0xff]
    %v56 = vld [vmem:[#allocation2 + $0x38] sm:$0xff]
    %v57 = vld [vmem:[#allocation2 + $0x40] sm:$0xff]
    %v58 = vld [vmem:[#allocation2 + $0x48] sm:$0xff]
    %v59 = vld [vmem:[#allocation2 + $0x50] sm:$0xff]
    %v60 = vld [vmem:[#allocation2 + $0x58] sm:$0xff]
    %v61 = vld [vmem:[#allocation2 + $0x60] sm:$0xff]
    %v62 = vld [vmem:[#allocation2 + $0x68] sm:$0xff]
    %v63 = vld [vmem:[#allocation2 + $0x70] sm:$0xff]
    %v64 = vld [vmem:[#allocation2 + $0x78] sm:$0xff]
    %v65 = vld [vmem:[#allocation2 + $0x80] sm:$0xff]
    %v66 = vld [vmem:[#allocation2 + $0x88] sm:$0xff]
    %v67 = vld [vmem:[#allocation2 + $0x90] sm:$0xff]
    %v68 = vld [vmem:[#allocation2 + $0x98] sm:$0xff]
    %v69 = vld [vmem:[#allocation2 + $0xa0] sm:$0xff]
    %v70 = vld [vmem:[#allocation2 + $0xa8] sm:$0xff]
    %v71 = vld [vmem:[#allocation2 + $0xb0] sm:$0xff]
    %v72 = vld [vmem:[#allocation2 + $0xb8] sm:$0xff]
    %v73 = vld [vmem:[#allocation2 + $0xc0] sm:$0xff]
    %v74 = vld [vmem:[#allocation2 + $0xc8] sm:$0xff]
    %v75 = vld [vmem:[#allocation2 + $0xd0] sm:$0xff]
    %v76 = vld [vmem:[#allocation2 + $0xd8] sm:$0xff]
    %v77 = vld [vmem:[#allocation2 + $0xe0] sm:$0xff]
    %v78 = vld [vmem:[#allocation2 + $0xe8] sm:$0xff]
    %v79 = vld [vmem:[#allocation2 + $0xf0] sm:$0xff]
    %v80 = vld [vmem:[#allocation2 + $0xf8] sm:$0xff]
    %v81 = vld [vmem:[#allocation2 + $0x100] sm:$0xff]
    %v82 = vld [vmem:[#allocation2 + $0x108] sm:$0xff]
    %v83 = vld [vmem:[#allocation2 + $0x110] sm:$0xff]
    %v84 = vld [vmem:[#allocation2 + $0x118] sm:$0xff]
    %v85 = vld [vmem:[#allocation2 + $0x120] sm:$0xff]
    %v86 = vld [vmem:[#allocation2 + $0x128] sm:$0xff]
    %v87 = vpack.c.bf16 %v50, %v49
    %v88 = vpack.c.bf16 %v52, %v51
    %v89 = vpack.c.bf16 %v54, %v53
    %v90 = vpack.c.bf16 %v56, %v55
    %v91 = vpack.c.bf16 %v58, %v57
    %v92 = vpack.c.bf16 %v60, %v59
    %v93 = vpack.c.bf16 %v62, %v61
    %v94 = vpack.c.bf16 %v64, %v63
    %v95 = vpack.c.bf16 %v66, %v65
    %v96 = vpack.c.bf16 %v68, %v67
    %v97 = vpack.c.bf16 %v70, %v69
    %v98 = vpack.c.bf16 %v72, %v71
    %v99 = vpack.c.bf16 %v74, %v73
    %v100 = vpack.c.bf16 %v76, %v75
    %v101 = vpack.c.bf16 %v78, %v77
    %v102 = vpack.c.bf16 %v80, %v79
    %v103 = vpack.c.bf16 %v82, %v81
    %v104 = vpack.c.bf16 %v84, %v83
    %v105 = vpack.c.bf16 %v86, %v85
    %v106 = vld [vmem:[%s1] sm:$0xf]
    %v107 = vld [vmem:[%s1 + $0x4] sm:$0xf]
    %v108 = vld [vmem:[%s1 + $0x8] sm:$0xf]
    %v109 = vld [vmem:[%s1 + $0xc] sm:$0xf]
    %v110 = vld [vmem:[%s1 + $0x10] sm:$0xf]
    %v111 = vld [vmem:[%s1 + $0x14] sm:$0xf]
    %v112 = vld [vmem:[%s1 + $0x18] sm:$0xf]
    %v113 = vld [vmem:[%s1 + $0x1c] sm:$0xf]
    %v114 = vld [vmem:[%s1 + $0x20] sm:$0xf]
    %v115 = vld [vmem:[%s1 + $0x24] sm:$0xf]
    %v116 = vld [vmem:[%s1 + $0x28] sm:$0xf]
    %v117 = vld [vmem:[%s1 + $0x2c] sm:$0xf]
    %v118 = vld [vmem:[%s1 + $0x30] sm:$0xf]
    %v119 = vld [vmem:[%s1 + $0x34] sm:$0xf]
    %v120 = vld [vmem:[%s1 + $0x38] sm:$0xf]
    %v121 = vld [vmem:[%s1 + $0x3c] sm:$0xf]
    %v122 = vld [vmem:[%s2] sm:$0x1]
    %v124 = vlaneseq
    %v125 = vshrl.u32 %v124, 7
    %v126 = vsub.s32 0, %v125
    %v127 = vrot.slane %v122, %v126
    %v145 = vunpack.c.l.b16 %v106
    %v146 = vunpack.c.l.b16 %v107
    %v147 = vunpack.c.l.b16 %v108
    %v148 = vunpack.c.l.b16 %v109
    %v149 = vunpack.c.l.b16 %v110
    %v150 = vunpack.c.l.b16 %v111
    %v151 = vunpack.c.l.b16 %v112
    %v152 = vunpack.c.l.b16 %v113
    %v153 = vunpack.c.l.b16 %v114
    %v154 = vunpack.c.l.b16 %v115
    %v155 = vunpack.c.l.b16 %v116
    %v156 = vunpack.c.l.b16 %v117
    %v157 = vunpack.c.l.b16 %v118
    %v158 = vunpack.c.l.b16 %v119
    %v159 = vunpack.c.l.b16 %v120
    %v160 = vunpack.c.l.b16 %v121
    %v161 = vpack.c.b16 %v146, %v145
    %v162 = vpack.c.b16 %v148, %v147
    %v163 = vpack.c.b16 %v150, %v149
    %v164 = vpack.c.b16 %v152, %v151
    %v165 = vpack.c.b16 %v154, %v153
    %v166 = vpack.c.b16 %v156, %v155
    %v167 = vpack.c.b16 %v158, %v157
    %v168 = vpack.c.b16 %v160, %v159
    %177 = vmatprep.subr.bf16.mxu0 0
    %178 = vmatpush1.bf16.msra.mxu0 %v168
    %179 = vmatprep.subr.bf16.mxu0 0
    %180 = vmatpush1.bf16.msra.mxu0 %v167
    %181 = vmatprep.subr.bf16.mxu0 0
    %182 = vmatpush1.bf16.msra.mxu0 %v166
    %183 = vmatprep.subr.bf16.mxu0 0
    %184 = vmatpush1.bf16.msra.mxu0 %v165
    %185 = vmatprep.subr.bf16.mxu0 0
    %186 = vmatpush1.bf16.msra.mxu0 %v164
    %187 = vmatprep.subr.bf16.mxu0 0
    %188 = vmatpush1.bf16.msra.mxu0 %v163
    %189 = vmatprep.subr.bf16.mxu0 0
    %190 = vmatpush1.bf16.msra.mxu0 %v162
    %191 = vmatprep.subr.bf16.mxu0 0
    %192 = vmatpush1.bf16.msra.mxu0 %v161
    %193 = vmatprep.subr.bf16.mxu0 0
    %194 = vmatpush2.bf16.msra.mxu0 0
    %195 = vmatprep.subr.bf16.mxu0 0
    %196 = vmatpush2.bf16.msra.mxu0 0
    %197 = vmatprep.subr.bf16.mxu0 0
    %198 = vmatpush2.bf16.msra.mxu0 0
    %199 = vmatprep.subr.bf16.mxu0 0
    %200 = vmatpush2.bf16.msra.mxu0 0
    %201 = vmatprep.subr.bf16.mxu0 0
    %202 = vmatpush2.bf16.msra.mxu0 0
    %203 = vmatprep.subr.bf16.mxu0 0
    %204 = vmatpush2.bf16.msra.mxu0 0
    %205 = vmatprep.subr.bf16.mxu0 0
    %206 = vmatpush2.bf16.msra.mxu0 0
    %207 = vmatprep.subr.bf16.mxu0 0
    %208 = vmatpush2.bf16.msra.mxu0 0
    %209 = vmatprep.mubr.bf16.mxu0 0
    %210 = vmatmul.mubr.bf16.gmra.mxu0 %v87
    %v211 = vpop.f32.mrf.mxu0
    %v212 = vadd.f32 %v127, %v211
    %v213 = vpop.f32.mrf.mxu0
    %v214 = vpop.f32.mrf.mxu0
    %v215 = vadd.f32 %v127, %v214
    %v216 = vpop.f32.mrf.mxu0
    %217 = vmatprep.mubr.bf16.mxu0 0
    %218 = vmatmul.mubr.bf16.gmra.mxu0 %v88
    %v219 = vpop.f32.mrf.mxu0
    %v220 = vadd.f32 %v127, %v219
    %v221 = vpop.f32.mrf.mxu0
    %v222 = vpop.f32.mrf.mxu0
    %v223 = vadd.f32 %v127, %v222
    %v224 = vpop.f32.mrf.mxu0
    %225 = vmatprep.mubr.bf16.mxu0 0
    %226 = vmatmul.mubr.bf16.gmra.mxu0 %v89
    %v227 = vpop.f32.mrf.mxu0
    %v228 = vadd.f32 %v127, %v227
    %v229 = vpop.f32.mrf.mxu0
    %v230 = vpop.f32.mrf.mxu0
    %v231 = vadd.f32 %v127, %v230
    %v232 = vpop.f32.mrf.mxu0
    %233 = vmatprep.mubr.bf16.mxu0 0
    %234 = vmatmul.mubr.bf16.gmra.mxu0 %v90
    %v235 = vpop.f32.mrf.mxu0
    %v236 = vadd.f32 %v127, %v235
    %v237 = vpop.f32.mrf.mxu0
    %v238 = vpop.f32.mrf.mxu0
    %v239 = vadd.f32 %v127, %v238
    %v240 = vpop.f32.mrf.mxu0
    %241 = vmatprep.mubr.bf16.mxu0 0
    %242 = vmatmul.mubr.bf16.gmra.mxu0 %v91
    %v243 = vpop.f32.mrf.mxu0
    %v244 = vadd.f32 %v127, %v243
    %v245 = vpop.f32.mrf.mxu0
    %v246 = vpop.f32.mrf.mxu0
    %v247 = vadd.f32 %v127, %v246
    %v248 = vpop.f32.mrf.mxu0
    %249 = vmatprep.mubr.bf16.mxu0 0
    %250 = vmatmul.mubr.bf16.gmra.mxu0 %v92
    %v251 = vpop.f32.mrf.mxu0
    %v252 = vadd.f32 %v127, %v251
    %v253 = vpop.f32.mrf.mxu0
    %v254 = vpop.f32.mrf.mxu0
    %v255 = vadd.f32 %v127, %v254
    %v256 = vpop.f32.mrf.mxu0
    %257 = vmatprep.mubr.bf16.mxu0 0
    %258 = vmatmul.mubr.bf16.gmra.mxu0 %v93
    %v259 = vpop.f32.mrf.mxu0
    %v260 = vadd.f32 %v127, %v259
    %v261 = vpop.f32.mrf.mxu0
    %v262 = vpop.f32.mrf.mxu0
    %v263 = vadd.f32 %v127, %v262
    %v264 = vpop.f32.mrf.mxu0
    %265 = vmatprep.mubr.bf16.mxu0 0
    %266 = vmatmul.mubr.bf16.gmra.mxu0 %v94
    %v267 = vpop.f32.mrf.mxu0
    %v268 = vadd.f32 %v127, %v267
    %v269 = vpop.f32.mrf.mxu0
    %v270 = vpop.f32.mrf.mxu0
    %v271 = vadd.f32 %v127, %v270
    %v272 = vpop.f32.mrf.mxu0
    %273 = vmatprep.mubr.bf16.mxu0 0
    %274 = vmatmul.mubr.bf16.gmra.mxu0 %v95
    %v275 = vpop.f32.mrf.mxu0
    %v276 = vadd.f32 %v127, %v275
    %v277 = vpop.f32.mrf.mxu0
    %v278 = vpop.f32.mrf.mxu0
    %v279 = vadd.f32 %v127, %v278
    %v280 = vpop.f32.mrf.mxu0
    %281 = vmatprep.mubr.bf16.mxu0 0
    %282 = vmatmul.mubr.bf16.gmra.mxu0 %v96
    %v283 = vpop.f32.mrf.mxu0
    %v284 = vadd.f32 %v127, %v283
    %v285 = vpop.f32.mrf.mxu0
    %v286 = vpop.f32.mrf.mxu0
    %v287 = vadd.f32 %v127, %v286
    %v288 = vpop.f32.mrf.mxu0
    %289 = vmatprep.mubr.bf16.mxu0 0
    %290 = vmatmul.mubr.bf16.gmra.mxu0 %v97
    %v291 = vpop.f32.mrf.mxu0
    %v292 = vadd.f32 %v127, %v291
    %v293 = vpop.f32.mrf.mxu0
    %v294 = vpop.f32.mrf.mxu0
    %v295 = vadd.f32 %v127, %v294
    %v296 = vpop.f32.mrf.mxu0
    %297 = vmatprep.mubr.bf16.mxu0 0
    %298 = vmatmul.mubr.bf16.gmra.mxu0 %v98
    %v299 = vpop.f32.mrf.mxu0
    %v300 = vadd.f32 %v127, %v299
    %v301 = vpop.f32.mrf.mxu0
    %v302 = vpop.f32.mrf.mxu0
    %v303 = vadd.f32 %v127, %v302
    %v304 = vpop.f32.mrf.mxu0
    %305 = vmatprep.mubr.bf16.mxu0 0
    %306 = vmatmul.mubr.bf16.gmra.mxu0 %v99
    %v307 = vpop.f32.mrf.mxu0
    %v308 = vadd.f32 %v127, %v307
    %v309 = vpop.f32.mrf.mxu0
    %v310 = vpop.f32.mrf.mxu0
    %v311 = vadd.f32 %v127, %v310
    %v312 = vpop.f32.mrf.mxu0
    %313 = vmatprep.mubr.bf16.mxu0 0
    %314 = vmatmul.mubr.bf16.gmra.mxu0 %v100
    %v315 = vpop.f32.mrf.mxu0
    %v316 = vadd.f32 %v127, %v315
    %v317 = vpop.f32.mrf.mxu0
    %v318 = vpop.f32.mrf.mxu0
    %v319 = vadd.f32 %v127, %v318
    %v320 = vpop.f32.mrf.mxu0
    %321 = vmatprep.mubr.bf16.mxu0 0
    %322 = vmatmul.mubr.bf16.gmra.mxu0 %v101
    %v323 = vpop.f32.mrf.mxu0
    %v324 = vadd.f32 %v127, %v323
    %v325 = vpop.f32.mrf.mxu0
    %v326 = vpop.f32.mrf.mxu0
    %v327 = vadd.f32 %v127, %v326
    %v328 = vpop.f32.mrf.mxu0
    %329 = vmatprep.mubr.bf16.mxu0 0
    %330 = vmatmul.mubr.bf16.gmra.mxu0 %v102
    %v331 = vpop.f32.mrf.mxu0
    %v332 = vadd.f32 %v127, %v331
    %v333 = vpop.f32.mrf.mxu0
    %v334 = vpop.f32.mrf.mxu0
    %v335 = vadd.f32 %v127, %v334
    %v336 = vpop.f32.mrf.mxu0
    %337 = vmatprep.mubr.bf16.mxu0 0
    %338 = vmatmul.mubr.bf16.gmra.mxu0 %v103
    %v339 = vpop.f32.mrf.mxu0
    %v340 = vadd.f32 %v127, %v339
    %v341 = vpop.f32.mrf.mxu0
    %v342 = vpop.f32.mrf.mxu0
    %v343 = vadd.f32 %v127, %v342
    %v344 = vpop.f32.mrf.mxu0
    %345 = vmatprep.mubr.bf16.mxu0 0
    %346 = vmatmul.mubr.bf16.gmra.mxu0 %v104
    %v347 = vpop.f32.mrf.mxu0
    %v348 = vadd.f32 %v127, %v347
    %v349 = vpop.f32.mrf.mxu0
    %v350 = vpop.f32.mrf.mxu0
    %v351 = vadd.f32 %v127, %v350
    %v352 = vpop.f32.mrf.mxu0
    %353 = vmatprep.mubr.bf16.mxu0 0
    %354 = vmatmul.mubr.bf16.gmra.mxu0 %v105
    %v355 = vpop.f32.mrf.mxu0
    %v356 = vadd.f32 %v127, %v355
    %v357 = vpop.f32.mrf.mxu0
    %v358 = vpop.f32.mrf.mxu0
    %v359 = vadd.f32 %v127, %v358
    %v360 = vpop.f32.mrf.mxu0
    %361 = vdwg.mxu0
    %v362 = vtanh.pop %v212
    %v363 = vtanh.pop %v215
    %v364 = vtanh.pop %v220
    %v365 = vtanh.pop %v223
    %v366 = vtanh.pop %v228
    %v367 = vtanh.pop %v231
    %v368 = vtanh.pop %v236
    %v369 = vtanh.pop %v239
    %v370 = vtanh.pop %v244
    %v371 = vtanh.pop %v247
    %v372 = vtanh.pop %v252
    %v373 = vtanh.pop %v255
    %v374 = vtanh.pop %v260
    %v375 = vtanh.pop %v263
    %v376 = vtanh.pop %v268
    %v377 = vtanh.pop %v271
    %v378 = vtanh.pop %v276
    %v379 = vtanh.pop %v279
    %v380 = vtanh.pop %v284
    %v381 = vtanh.pop %v287
    %v382 = vtanh.pop %v292
    %v383 = vtanh.pop %v295
    %v384 = vtanh.pop %v300
    %v385 = vtanh.pop %v303
    %v386 = vtanh.pop %v308
    %v387 = vtanh.pop %v311
    %v388 = vtanh.pop %v316
    %v389 = vtanh.pop %v319
    %v390 = vtanh.pop %v324
    %v391 = vtanh.pop %v327
    %v392 = vtanh.pop %v332
    %v393 = vtanh.pop %v335
    %v394 = vtanh.pop %v340
    %v395 = vtanh.pop %v343
    %v396 = vtanh.pop %v348
    %v397 = vtanh.pop %v351
    %v398 = vtanh.pop %v356
    %v399 = vtanh.pop %v359
    %v400 = vpack.c.bf16 %v363, %v362
    %v401 = vpack.c.bf16 %v365, %v364
    %v402 = vpack.c.bf16 %v367, %v366
    %v403 = vpack.c.bf16 %v369, %v368
    %v404 = vpack.c.bf16 %v371, %v370
    %v405 = vpack.c.bf16 %v373, %v372
    %v406 = vpack.c.bf16 %v375, %v374
    %v407 = vpack.c.bf16 %v377, %v376
    %v408 = vpack.c.bf16 %v379, %v378
    %v409 = vpack.c.bf16 %v381, %v380
    %v410 = vpack.c.bf16 %v383, %v382
    %v411 = vpack.c.bf16 %v385, %v384
    %v412 = vpack.c.bf16 %v387, %v386
    %v413 = vpack.c.bf16 %v389, %v388
    %v414 = vpack.c.bf16 %v391, %v390
    %v415 = vpack.c.bf16 %v393, %v392
    %v416 = vpack.c.bf16 %v395, %v394
    %v417 = vpack.c.bf16 %v397, %v396
    %v418 = vpack.c.bf16 %v399, %v398
    %v419 = vld [vmem:[%s3] sm:$0xf]
    %v420 = vld [vmem:[%s3 + $0x4] sm:$0xf]
    %v421 = vld [vmem:[%s3 + $0x8] sm:$0xf]
    %v422 = vld [vmem:[%s3 + $0xc] sm:$0xf]
    %v423 = vld [vmem:[%s3 + $0x10] sm:$0xf]
    %v424 = vld [vmem:[%s3 + $0x14] sm:$0xf]
    %v425 = vld [vmem:[%s3 + $0x18] sm:$0xf]
    %v426 = vld [vmem:[%s3 + $0x1c] sm:$0xf]
    %v435 = vunpack.c.l.b16 %v419
    %v436 = vunpack.c.l.b16 %v420
    %v437 = vunpack.c.l.b16 %v421
    %v438 = vunpack.c.l.b16 %v422
    %v439 = vunpack.c.l.b16 %v423
    %v440 = vunpack.c.l.b16 %v424
    %v441 = vunpack.c.l.b16 %v425
    %v442 = vunpack.c.l.b16 %v426
    %v443 = vpack.c.b16 %v436, %v435
    %v444 = vpack.c.b16 %v438, %v437
    %v445 = vpack.c.b16 %v440, %v439
    %v446 = vpack.c.b16 %v442, %v441
    %vm451 = vcmask 523264
    %v453 = vsel %vm451, %v400, 0
    %v456 = vsel %vm451, %v401, 0
    %v459 = vsel %vm451, %v402, 0
    %v462 = vsel %vm451, %v403, 0
    %v465 = vsel %vm451, %v404, 0
    %v468 = vsel %vm451, %v405, 0
    %v471 = vsel %vm451, %v406, 0
    %v474 = vsel %vm451, %v407, 0
    %v477 = vsel %vm451, %v408, 0
    %v480 = vsel %vm451, %v409, 0
    %v483 = vsel %vm451, %v410, 0
    %v486 = vsel %vm451, %v411, 0
    %v489 = vsel %vm451, %v412, 0
    %v492 = vsel %vm451, %v413, 0
    %v495 = vsel %vm451, %v414, 0
    %v498 = vsel %vm451, %v415, 0
    %v501 = vsel %vm451, %v416, 0
    %v504 = vsel %vm451, %v417, 0
    %v507 = vsel %vm451, %v418, 0
    %509 = vmatprep.subr.bf16.mxu0 0
    %510 = vmatpush1.bf16.msra.mxu0 0
    %511 = vmatprep.subr.bf16.mxu0 0
    %512 = vmatpush1.bf16.msra.mxu0 0
    %513 = vmatprep.subr.bf16.mxu0 0
    %514 = vmatpush1.bf16.msra.mxu0 0
    %515 = vmatprep.subr.bf16.mxu0 0
    %516 = vmatpush1.bf16.msra.mxu0 0
    %517 = vmatprep.subr.bf16.mxu0 0
    %518 = vmatpush1.bf16.msra.mxu0 %v446
    %519 = vmatprep.subr.bf16.mxu0 0
    %520 = vmatpush1.bf16.msra.mxu0 %v445
    %521 = vmatprep.subr.bf16.mxu0 0
    %522 = vmatpush1.bf16.msra.mxu0 %v444
    %523 = vmatprep.subr.bf16.mxu0 0
    %524 = vmatpush1.bf16.msra.mxu0 %v443
    %525 = vmatprep.subr.bf16.mxu0 0
    %526 = vmatpush2.bf16.msra.mxu0 0
    %527 = vmatprep.subr.bf16.mxu0 0
    %528 = vmatpush2.bf16.msra.mxu0 0
    %529 = vmatprep.subr.bf16.mxu0 0
    %530 = vmatpush2.bf16.msra.mxu0 0
    %531 = vmatprep.subr.bf16.mxu0 0
    %532 = vmatpush2.bf16.msra.mxu0 0
    %533 = vmatprep.subr.bf16.mxu0 0
    %534 = vmatpush2.bf16.msra.mxu0 0
    %535 = vmatprep.subr.bf16.mxu0 0
    %536 = vmatpush2.bf16.msra.mxu0 0
    %537 = vmatprep.subr.bf16.mxu0 0
    %538 = vmatpush2.bf16.msra.mxu0 0
    %539 = vmatprep.subr.bf16.mxu0 0
    %540 = vmatpush2.bf16.msra.mxu0 0
    %541 = vmatprep.mubr.bf16.mxu0 0
    %542 = vmatmul.mubr.bf16.gmra.mxu0 %v453
    %v543 = vpop.f32.mrf.mxu0
    %v544 = vadd.f32 0.0, %v543
    %v545 = vpop.f32.mrf.mxu0
    %v546 = vpop.f32.mrf.mxu0
    %v547 = vadd.f32 0.0, %v546
    %v548 = vpop.f32.mrf.mxu0
    %549 = vmatprep.mubr.bf16.mxu0 0
    %550 = vmatmul.mubr.bf16.gmra.mxu0 %v456
    %v551 = vpop.f32.mrf.mxu0
    %v552 = vadd.f32 0.0, %v551
    %v553 = vpop.f32.mrf.mxu0
    %v554 = vpop.f32.mrf.mxu0
    %v555 = vadd.f32 0.0, %v554
    %v556 = vpop.f32.mrf.mxu0
    %557 = vmatprep.mubr.bf16.mxu0 0
    %558 = vmatmul.mubr.bf16.gmra.mxu0 %v459
    %v559 = vpop.f32.mrf.mxu0
    %v560 = vadd.f32 0.0, %v559
    %v561 = vpop.f32.mrf.mxu0
    %v562 = vpop.f32.mrf.mxu0
    %v563 = vadd.f32 0.0, %v562
    %v564 = vpop.f32.mrf.mxu0
    %565 = vmatprep.mubr.bf16.mxu0 0
    %566 = vmatmul.mubr.bf16.gmra.mxu0 %v462
    %v567 = vpop.f32.mrf.mxu0
    %v568 = vadd.f32 0.0, %v567
    %v569 = vpop.f32.mrf.mxu0
    %v570 = vpop.f32.mrf.mxu0
    %v571 = vadd.f32 0.0, %v570
    %v572 = vpop.f32.mrf.mxu0
    %573 = vmatprep.mubr.bf16.mxu0 0
    %574 = vmatmul.mubr.bf16.gmra.mxu0 %v465
    %v575 = vpop.f32.mrf.mxu0
    %v576 = vadd.f32 0.0, %v575
    %v577 = vpop.f32.mrf.mxu0
    %v578 = vpop.f32.mrf.mxu0
    %v579 = vadd.f32 0.0, %v578
    %v580 = vpop.f32.mrf.mxu0
    %581 = vmatprep.mubr.bf16.mxu0 0
    %582 = vmatmul.mubr.bf16.gmra.mxu0 %v468
    %v583 = vpop.f32.mrf.mxu0
    %v584 = vadd.f32 0.0, %v583
    %v585 = vpop.f32.mrf.mxu0
    %v586 = vpop.f32.mrf.mxu0
    %v587 = vadd.f32 0.0, %v586
    %v588 = vpop.f32.mrf.mxu0
    %589 = vmatprep.mubr.bf16.mxu0 0
    %590 = vmatmul.mubr.bf16.gmra.mxu0 %v471
    %v591 = vpop.f32.mrf.mxu0
    %v592 = vadd.f32 0.0, %v591
    %v593 = vpop.f32.mrf.mxu0
    %v594 = vpop.f32.mrf.mxu0
    %v595 = vadd.f32 0.0, %v594
    %v596 = vpop.f32.mrf.mxu0
    %597 = vmatprep.mubr.bf16.mxu0 0
    %598 = vmatmul.mubr.bf16.gmra.mxu0 %v474
    %v599 = vpop.f32.mrf.mxu0
    %v600 = vadd.f32 0.0, %v599
    %v601 = vpop.f32.mrf.mxu0
    %v602 = vpop.f32.mrf.mxu0
    %v603 = vadd.f32 0.0, %v602
    %v604 = vpop.f32.mrf.mxu0
    %605 = vmatprep.mubr.bf16.mxu0 0
    %606 = vmatmul.mubr.bf16.gmra.mxu0 %v477
    %v607 = vpop.f32.mrf.mxu0
    %v608 = vadd.f32 0.0, %v607
    %v609 = vpop.f32.mrf.mxu0
    %v610 = vpop.f32.mrf.mxu0
    %v611 = vadd.f32 0.0, %v610
    %v612 = vpop.f32.mrf.mxu0
    %613 = vmatprep.mubr.bf16.mxu0 0
    %614 = vmatmul.mubr.bf16.gmra.mxu0 %v480
    %v615 = vpop.f32.mrf.mxu0
    %v616 = vadd.f32 0.0, %v615
    %v617 = vpop.f32.mrf.mxu0
    %v618 = vpop.f32.mrf.mxu0
    %v619 = vadd.f32 0.0, %v618
    %v620 = vpop.f32.mrf.mxu0
    %621 = vmatprep.mubr.bf16.mxu0 0
    %622 = vmatmul.mubr.bf16.gmra.mxu0 %v483
    %v623 = vpop.f32.mrf.mxu0
    %v624 = vadd.f32 0.0, %v623
    %v625 = vpop.f32.mrf.mxu0
    %v626 = vpop.f32.mrf.mxu0
    %v627 = vadd.f32 0.0, %v626
    %v628 = vpop.f32.mrf.mxu0
    %629 = vmatprep.mubr.bf16.mxu0 0
    %630 = vmatmul.mubr.bf16.gmra.mxu0 %v486
    %v631 = vpop.f32.mrf.mxu0
    %v632 = vadd.f32 0.0, %v631
    %v633 = vpop.f32.mrf.mxu0
    %v634 = vpop.f32.mrf.mxu0
    %v635 = vadd.f32 0.0, %v634
    %v636 = vpop.f32.mrf.mxu0
    %637 = vmatprep.mubr.bf16.mxu0 0
    %638 = vmatmul.mubr.bf16.gmra.mxu0 %v489
    %v639 = vpop.f32.mrf.mxu0
    %v640 = vadd.f32 0.0, %v639
    %v641 = vpop.f32.mrf.mxu0
    %v642 = vpop.f32.mrf.mxu0
    %v643 = vadd.f32 0.0, %v642
    %v644 = vpop.f32.mrf.mxu0
    %645 = vmatprep.mubr.bf16.mxu0 0
    %646 = vmatmul.mubr.bf16.gmra.mxu0 %v492
    %v647 = vpop.f32.mrf.mxu0
    %v648 = vadd.f32 0.0, %v647
    %v649 = vpop.f32.mrf.mxu0
    %v650 = vpop.f32.mrf.mxu0
    %v651 = vadd.f32 0.0, %v650
    %v652 = vpop.f32.mrf.mxu0
    %653 = vmatprep.mubr.bf16.mxu0 0
    %654 = vmatmul.mubr.bf16.gmra.mxu0 %v495
    %v655 = vpop.f32.mrf.mxu0
    %v656 = vadd.f32 0.0, %v655
    %v657 = vpop.f32.mrf.mxu0
    %v658 = vpop.f32.mrf.mxu0
    %v659 = vadd.f32 0.0, %v658
    %v660 = vpop.f32.mrf.mxu0
    %661 = vmatprep.mubr.bf16.mxu0 0
    %662 = vmatmul.mubr.bf16.gmra.mxu0 %v498
    %v663 = vpop.f32.mrf.mxu0
    %v664 = vadd.f32 0.0, %v663
    %v665 = vpop.f32.mrf.mxu0
    %v666 = vpop.f32.mrf.mxu0
    %v667 = vadd.f32 0.0, %v666
    %v668 = vpop.f32.mrf.mxu0
    %669 = vmatprep.mubr.bf16.mxu0 0
    %670 = vmatmul.mubr.bf16.gmra.mxu0 %v501
    %v671 = vpop.f32.mrf.mxu0
    %v672 = vadd.f32 0.0, %v671
    %v673 = vpop.f32.mrf.mxu0
    %v674 = vpop.f32.mrf.mxu0
    %v675 = vadd.f32 0.0, %v674
    %v676 = vpop.f32.mrf.mxu0
    %677 = vmatprep.mubr.bf16.mxu0 0
    %678 = vmatmul.mubr.bf16.gmra.mxu0 %v504
    %v679 = vpop.f32.mrf.mxu0
    %v680 = vadd.f32 0.0, %v679
    %v681 = vpop.f32.mrf.mxu0
    %v682 = vpop.f32.mrf.mxu0
    %v683 = vadd.f32 0.0, %v682
    %v684 = vpop.f32.mrf.mxu0
    %685 = vmatprep.mubr.bf16.mxu0 0
    %686 = vmatmul.mubr.bf16.gmra.mxu0 %v507
    %v687 = vpop.f32.mrf.mxu0
    %v688 = vadd.f32 0.0, %v687
    %v689 = vpop.f32.mrf.mxu0
    %v690 = vpop.f32.mrf.mxu0
    %v691 = vadd.f32 0.0, %v690
    %v692 = vpop.f32.mrf.mxu0
    %693 = vdwg.mxu0
    %s694 = sadd.s32 0, 0
    %s695 = smul.u32 %s694, 304
    %v696 = vlaneseq
    %v697 = vshrl.u32 %v696, 7
    %v698 = vadd.s32 %v697, 8
    %v699 = vadd.s32 %v697, 16
    %v700 = vadd.s32 %v697, 24
    %v701 = vadd.s32 %v697, 32
    %v702 = vadd.s32 %v697, 40
    %v703 = vadd.s32 %v697, 48
    %v704 = vadd.s32 %v697, 56
    %v705 = vadd.s32 %v697, 64
    %v706 = vadd.s32 %v697, 72
    %v707 = vadd.s32 %v697, 80
    %v708 = vadd.s32 %v697, 88
    %v709 = vadd.s32 %v697, 96
    %v710 = vadd.s32 %v697, 104
    %v711 = vadd.s32 %v697, 112
    %v712 = vadd.s32 %v697, 120
    %v713 = vadd.s32 %v697, 128
    %v714 = vadd.s32 %v697, 136
    %v715 = vadd.s32 %v697, 144
    %v716 = vadd.s32 %v697, 152
    %v717 = vadd.s32 %v697, 160
    %v718 = vadd.s32 %v697, 168
    %v719 = vadd.s32 %v697, 176
    %v720 = vadd.s32 %v697, 184
    %v721 = vadd.s32 %v697, 192
    %v722 = vadd.s32 %v697, 200
    %v723 = vadd.s32 %v697, 208
    %v724 = vadd.s32 %v697, 216
    %v725 = vadd.s32 %v697, 224
    %v726 = vadd.s32 %v697, 232
    %v727 = vadd.s32 %v697, 240
    %v728 = vadd.s32 %v697, 248
    %v729 = vadd.s32 %v697, 256
    %v730 = vadd.s32 %v697, 264
    %v731 = vadd.s32 %v697, 272
    %v732 = vadd.s32 %v697, 280
    %v733 = vadd.s32 %v697, 288
    %v734 = vadd.s32 %v697, 296
    %v735 = vstv %s695
    %v736 = vadd.s32 %v735, %v697
    %v737 = vadd.s32 %v735, %v698
    %v738 = vadd.s32 %v735, %v699
    %v739 = vadd.s32 %v735, %v700
    %v740 = vadd.s32 %v735, %v701
    %v741 = vadd.s32 %v735, %v702
    %v742 = vadd.s32 %v735, %v703
    %v743 = vadd.s32 %v735, %v704
    %v744 = vadd.s32 %v735, %v705
    %v745 = vadd.s32 %v735, %v706
    %v746 = vadd.s32 %v735, %v707
    %v747 = vadd.s32 %v735, %v708
    %v748 = vadd.s32 %v735, %v709
    %v749 = vadd.s32 %v735, %v710
    %v750 = vadd.s32 %v735, %v711
    %v751 = vadd.s32 %v735, %v712
    %v752 = vadd.s32 %v735, %v713
    %v753 = vadd.s32 %v735, %v714
    %v754 = vadd.s32 %v735, %v715
    %v755 = vadd.s32 %v735, %v716
    %v756 = vadd.s32 %v735, %v717
    %v757 = vadd.s32 %v735, %v718
    %v758 = vadd.s32 %v735, %v719
    %v759 = vadd.s32 %v735, %v720
    %v760 = vadd.s32 %v735, %v721
    %v761 = vadd.s32 %v735, %v722
    %v762 = vadd.s32 %v735, %v723
    %v763 = vadd.s32 %v735, %v724
    %v764 = vadd.s32 %v735, %v725
    %v765 = vadd.s32 %v735, %v726
    %v766 = vadd.s32 %v735, %v727
    %v767 = vadd.s32 %v735, %v728
    %v768 = vadd.s32 %v735, %v729
    %v769 = vadd.s32 %v735, %v730
    %v770 = vadd.s32 %v735, %v731
    %v771 = vadd.s32 %v735, %v732
    %v772 = vadd.s32 %v735, %v733
    %v773 = vadd.s32 %v735, %v734
    %vm774 = vcmp.lt.s32.totalorder %v736, 300
    %vm775 = vcmp.lt.s32.totalorder %v737, 300
    %vm776 = vcmp.lt.s32.totalorder %v738, 300
    %vm777 = vcmp.lt.s32.totalorder %v739, 300
    %vm778 = vcmp.lt.s32.totalorder %v740, 300
    %vm779 = vcmp.lt.s32.totalorder %v741, 300
    %vm780 = vcmp.lt.s32.totalorder %v742, 300
    %vm781 = vcmp.lt.s32.totalorder %v743, 300
    %vm782 = vcmp.lt.s32.totalorder %v744, 300
    %vm783 = vcmp.lt.s32.totalorder %v745, 300
    %vm784 = vcmp.lt.s32.totalorder %v746, 300
    %vm785 = vcmp.lt.s32.totalorder %v747, 300
    %vm786 = vcmp.lt.s32.totalorder %v748, 300
    %vm787 = vcmp.lt.s32.totalorder %v749, 300
    %vm788 = vcmp.lt.s32.totalorder %v750, 300
    %vm789 = vcmp.lt.s32.totalorder %v751, 300
    %vm790 = vcmp.lt.s32.totalorder %v752, 300
    %vm791 = vcmp.lt.s32.totalorder %v753, 300
    %vm792 = vcmp.lt.s32.totalorder %v754, 300
    %vm793 = vcmp.lt.s32.totalorder %v755, 300
    %vm794 = vcmp.lt.s32.totalorder %v756, 300
    %vm795 = vcmp.lt.s32.totalorder %v757, 300
    %vm796 = vcmp.lt.s32.totalorder %v758, 300
    %vm797 = vcmp.lt.s32.totalorder %v759, 300
    %vm798 = vcmp.lt.s32.totalorder %v760, 300
    %vm799 = vcmp.lt.s32.totalorder %v761, 300
    %vm800 = vcmp.lt.s32.totalorder %v762, 300
    %vm801 = vcmp.lt.s32.totalorder %v763, 300
    %vm802 = vcmp.lt.s32.totalorder %v764, 300
    %vm803 = vcmp.lt.s32.totalorder %v765, 300
    %vm804 = vcmp.lt.s32.totalorder %v766, 300
    %vm805 = vcmp.lt.s32.totalorder %v767, 300
    %vm806 = vcmp.lt.s32.totalorder %v768, 300
    %vm807 = vcmp.lt.s32.totalorder %v769, 300
    %vm808 = vcmp.lt.s32.totalorder %v770, 300
    %vm809 = vcmp.lt.s32.totalorder %v771, 300
    %vm810 = vcmp.lt.s32.totalorder %v772, 300
    %vm811 = vcmp.lt.s32.totalorder %v773, 300
    %v812 = vsel %vm774, %v544, 0.0
    %v813 = vsel %vm775, %v547, 0.0
    %v814 = vsel %vm776, %v552, 0.0
    %v815 = vsel %vm777, %v555, 0.0
    %v816 = vsel %vm778, %v560, 0.0
    %v817 = vsel %vm779, %v563, 0.0
    %v818 = vsel %vm780, %v568, 0.0
    %v819 = vsel %vm781, %v571, 0.0
    %v820 = vsel %vm782, %v576, 0.0
    %v821 = vsel %vm783, %v579, 0.0
    %v822 = vsel %vm784, %v584, 0.0
    %v823 = vsel %vm785, %v587, 0.0
    %v824 = vsel %vm786, %v592, 0.0
    %v825 = vsel %vm787, %v595, 0.0
    %v826 = vsel %vm788, %v600, 0.0
    %v827 = vsel %vm789, %v603, 0.0
    %v828 = vsel %vm790, %v608, 0.0
    %v829 = vsel %vm791, %v611, 0.0
    %v830 = vsel %vm792, %v616, 0.0
    %v831 = vsel %vm793, %v619, 0.0
    %v832 = vsel %vm794, %v624, 0.0
    %v833 = vsel %vm795, %v627, 0.0
    %v834 = vsel %vm796, %v632, 0.0
    %v835 = vsel %vm797, %v635, 0.0
    %v836 = vsel %vm798, %v640, 0.0
    %v837 = vsel %vm799, %v643, 0.0
    %v838 = vsel %vm800, %v648, 0.0
    %v839 = vsel %vm801, %v651, 0.0
    %v840 = vsel %vm802, %v656, 0.0
    %v841 = vsel %vm803, %v659, 0.0
    %v842 = vsel %vm804, %v664, 0.0
    %v843 = vsel %vm805, %v667, 0.0
    %v844 = vsel %vm806, %v672, 0.0
    %v845 = vsel %vm807, %v675, 0.0
    %v846 = vsel %vm808, %v680, 0.0
    %v847 = vsel %vm809, %v683, 0.0
    %v848 = vsel %vm810, %v688, 0.0
    %v849 = vsel %vm811, %v691, 0.0
    %v850 = vld [vmem:[#allocation5] sm:$0x1]
    %vm851 = vcmask 31744
    %v852 = vsel %vm851, %v812, 0.0
    %v853 = vsel %vm851, %v813, 0.0
    %v854 = vadd.f32 %v852, %v853
    %v855 = vsel %vm851, %v814, 0.0
    %v856 = vadd.f32 %v854, %v855
    %v857 = vsel %vm851, %v815, 0.0
    %v858 = vadd.f32 %v856, %v857
    %v859 = vsel %vm851, %v816, 0.0
    %v860 = vadd.f32 %v858, %v859
    %v861 = vsel %vm851, %v817, 0.0
    %v862 = vadd.f32 %v860, %v861
    %v863 = vsel %vm851, %v818, 0.0
    %v864 = vadd.f32 %v862, %v863
    %v865 = vsel %vm851, %v819, 0.0
    %v866 = vadd.f32 %v864, %v865
    %v867 = vsel %vm851, %v820, 0.0
    %v868 = vadd.f32 %v866, %v867
    %v869 = vsel %vm851, %v821, 0.0
    %v870 = vadd.f32 %v868, %v869
    %v871 = vsel %vm851, %v822, 0.0
    %v872 = vadd.f32 %v870, %v871
    %v873 = vsel %vm851, %v823, 0.0
    %v874 = vadd.f32 %v872, %v873
    %v875 = vsel %vm851, %v824, 0.0
    %v876 = vadd.f32 %v874, %v875
    %v877 = vsel %vm851, %v825, 0.0
    %v878 = vadd.f32 %v876, %v877
    %v879 = vsel %vm851, %v826, 0.0
    %v880 = vadd.f32 %v878, %v879
    %v881 = vsel %vm851, %v827, 0.0
    %v882 = vadd.f32 %v880, %v881
    %v883 = vsel %vm851, %v828, 0.0
    %v884 = vadd.f32 %v882, %v883
    %v885 = vsel %vm851, %v829, 0.0
    %v886 = vadd.f32 %v884, %v885
    %v887 = vsel %vm851, %v830, 0.0
    %v888 = vadd.f32 %v886, %v887
    %v889 = vsel %vm851, %v831, 0.0
    %v890 = vadd.f32 %v888, %v889
    %v891 = vsel %vm851, %v832, 0.0
    %v892 = vadd.f32 %v890, %v891
    %v893 = vsel %vm851, %v833, 0.0
    %v894 = vadd.f32 %v892, %v893
    %v895 = vsel %vm851, %v834, 0.0
    %v896 = vadd.f32 %v894, %v895
    %v897 = vsel %vm851, %v835, 0.0
    %v898 = vadd.f32 %v896, %v897
    %v899 = vsel %vm851, %v836, 0.0
    %v900 = vadd.f32 %v898, %v899
    %v901 = vsel %vm851, %v837, 0.0
    %v902 = vadd.f32 %v900, %v901
    %v903 = vsel %vm851, %v838, 0.0
    %v904 = vadd.f32 %v902, %v903
    %v905 = vsel %vm851, %v839, 0.0
    %v906 = vadd.f32 %v904, %v905
    %v907 = vsel %vm851, %v840, 0.0
    %v908 = vadd.f32 %v906, %v907
    %v909 = vsel %vm851, %v841, 0.0
    %v910 = vadd.f32 %v908, %v909
    %v911 = vsel %vm851, %v842, 0.0
    %v912 = vadd.f32 %v910, %v911
    %v913 = vsel %vm851, %v843, 0.0
    %v914 = vadd.f32 %v912, %v913
    %v915 = vsel %vm851, %v844, 0.0
    %v916 = vadd.f32 %v914, %v915
    %v917 = vsel %vm851, %v845, 0.0
    %v918 = vadd.f32 %v916, %v917
    %v919 = vsel %vm851, %v846, 0.0
    %v920 = vadd.f32 %v918, %v919
    %v921 = vsel %vm851, %v847, 0.0
    %v922 = vadd.f32 %v920, %v921
    %v923 = vsel %vm851, %v848, 0.0
    %v924 = vadd.f32 %v922, %v923
    %v925 = vsel %vm851, %v849, 0.0
    %v926 = vadd.f32 %v924, %v925
    %v927 = vrot.slane %v926, 4
    %v928 = vadd.f32 %v926, %v927
    %v929 = vrot.slane %v928, 2
    %v930 = vadd.f32 %v928, %v929
    %v931 = vrot.slane %v930, 1
    %v932 = vadd.f32 %v930, %v931
    %v933 = vadd.f32 %v850, %v932
    %vm934 = vcmask 24576
    %935 = vst.msk [vmem:[#allocation5] sm:$0x1] %vm934, %v933
    // Predicated region
    $region26: #{tpu_custom_call.1} parent=1 // pred_check
      _
    $region27: #{tpu_custom_call.1} parent=1 // pred_check_branch
      %937 = sbr.rel (0) target = $region29
    $region28: #{tpu_custom_call.1} parent=1 // pred_region
      %s939 = ssub.s32 16, 16
      %940 = vsyncadd [#allocation4], %s939
      %s942 = sshll.u32 [#allocation5], 4
      %s943 = int_to_ptr.vmem [resolvable:$true] %s942
      %945 = dma.vmem_to_hbm [thread:$0]  %s943, 16, %s4, [#allocation4]
    $region29: #{tpu_custom_call.1} parent=1 // pred_fallthru
      _
    // Predicated region
    $region30: #{tpu_custom_call.1} parent=1 // pred_check
      _
    $region31: #{tpu_custom_call.1} parent=1 // pred_check_branch
      %947 = sbr.rel (0) target = $region33
    $region32: #{tpu_custom_call.1} parent=1 // pred_region
      %948 = dma.done [#allocation4], 16
    $region33: #{tpu_custom_call.1} parent=1 // pred_fallthru
      _
    %949 = vsyncpa [#allocation3], 1
    %950 = vsyncpa [#allocation4], 1

</llo_original>
